<compile_context>
chip_gen: v6e
topology: v6e:2x2x1
jax: 0.10.0
libtpu: 0.0.40
codegen_flags: <defaults>
</compile_context>

<pallas_src>
import math

import jax
import jax.numpy as jnp
import numpy as np
from jax.experimental import pallas as pl
from jax.experimental.pallas import tpu as pltpu


# ---------------------------------------------------------------------------
# Parameter construction (deterministic, mirrors the PyTorch __init__ exactly)
# ---------------------------------------------------------------------------
def get_freq_indices(channel):
    assert channel <= 15
    all_top_indices_x = [0, 0, 0, 1, 1, 3, 0, 2, 3, 2, 3, 3, 2, 2, 1]
    all_top_indices_y = [0, 1, 2, 0, 2, 0, 3, 2, 3, 1, 2, 1, 3, 0, 3]
    return all_top_indices_x[:channel], all_top_indices_y[:channel]


def _build_filter(pos, freq, POS):
    result = math.cos(math.pi * freq * (pos + 0.5) / POS) / math.sqrt(POS)
    if freq == 0:
        return result
    return result * math.sqrt(2)


def get_dct_filter(tile_size_x, tile_size_y, mapper_x, mapper_y, channel):
    dct_filter = np.zeros((channel, tile_size_x, tile_size_y), dtype=np.float32)
    c_part = channel // len(mapper_x)
    for i, (u_x, v_y) in enumerate(zip(mapper_x, mapper_y)):
        for t_x in range(tile_size_x):
            for t_y in range(tile_size_y):
                dct_filter[i * c_part:(i + 1) * c_part, t_x, t_y] = (
                    _build_filter(t_x, u_x, tile_size_x)
                    * _build_filter(t_y, v_y, tile_size_y)
                )
    return dct_filter


def make_spectral_weight(channel, dct_h, dct_w):
    mapper_x, mapper_y = get_freq_indices(channel)
    # NOTE: matches the given PyTorch module exactly, which scales BOTH
    # mappers by (height // 4) (even when dct_h != dct_w).
    mapper_x = [tx * (dct_h // 4) for tx in mapper_x]
    mapper_y = [ty * (dct_h // 4) for ty in mapper_y]
    return get_dct_filter(dct_h, dct_w, mapper_x, mapper_y, channel)


def make_fc_weights(channel, key):
    # PyTorch nn.Linear default init: U(-1/sqrt(fan_in), 1/sqrt(fan_in)).
    k1, k2 = jax.random.split(key)
    bound = 1.0 / math.sqrt(channel)
    w1 = jax.random.uniform(k1, (channel, channel), jnp.float32, -bound, bound)
    w2 = jax.random.uniform(k2, (channel, channel), jnp.float32, -bound, bound)
    return w1, w2


# ---------------------------------------------------------------------------
# Pallas kernel: DCT-weighted spatial reduction + 2-layer MLP + broadcast mul
# ---------------------------------------------------------------------------
def msa_kernel(x_ref, dctw_ref, w1t_ref, w2t_ref, o_ref):
    x = x_ref[...]                                   # (Nb, C, HWp) f32
    dctw = dctw_ref[...]                             # (C, HWp)     f32

    # DCTLayer: per-(n, c) weighted sum over spatial positions (lane reduce).
    att = jnp.sum(x * dctw[None, :, :], axis=-1)     # (Nb, C)

    # fc[0]: Linear(C, C, bias=False) -> att @ W1.T  (W1.T passed pre-transposed)
    h = jnp.dot(att, w1t_ref[...], preferred_element_type=jnp.float32)
    # fc[1]: LeakyReLU(0.1)  (negative_slope=0.1 per the module spec)
    h = jnp.where(h > 0, h, 0.1 * h)
    # fc[2]: Linear(C, C, bias=False) -> h @ W2.T
    h = jnp.dot(h, w2t_ref[...], preferred_element_type=jnp.float32)
    # fc[3]: Sigmoid
    att = jax.nn.sigmoid(h)                          # (Nb, C)

    # x * att.view(N, C, 1, 1)  (spatial dims flattened on the lane axis)
    o_ref[...] = x * att[:, :, None]


def _round_up(a, b):
    return ((a + b - 1) // b) * b


def _pick_batch_block(n, c, hwp, target_bytes=2 * 1024 * 1024):
    # VMEM tile footprint counts the sublane-padded C (f32 tiles of 8 rows).
    bytes_per_sample = _round_up(c, 8) * hwp * 4
    nb = max(1, target_bytes // bytes_per_sample)
    return int(min(n, nb))


def multi_spectral_attention(x_nchw, spectral_weight, w1, w2):
    """x_nchw: (N, C, H, W) f32 with H == dct_h, W == dct_w.
    spectral_weight: (C, H, W).  w1, w2: (C, C) in PyTorch (out, in) layout."""
    N, C, H, W = x_nchw.shape
    HW = H * W
    HWp = _round_up(HW, 128)                 # lane-dense loads/stores

    x3 = x_nchw.reshape(N, C, HW)
    dctw = spectral_weight.reshape(C, HW)
    if HWp != HW:
        x3 = jnp.pad(x3, ((0, 0), (0, 0), (0, HWp - HW)))
        dctw = jnp.pad(dctw, ((0, 0), (0, HWp - HW)))   # zeros -> sum unchanged

    Nb = _pick_batch_block(N, C, HWp)
    Np = _round_up(N, Nb)
    if Np != N:
        x3 = jnp.pad(x3, ((0, Np - N), (0, 0), (0, 0)))  # padded rows are dropped

    # Pre-transpose FC weights so the kernel contracts against RHS axis 0.
    w1t = jnp.asarray(w1).T
    w2t = jnp.asarray(w2).T

    out = pl.pallas_call(
        msa_kernel,
        out_shape=jax.ShapeDtypeStruct((Np, C, HWp), jnp.float32),
        grid=(Np // Nb,),
        in_specs=[
            pl.BlockSpec((Nb, C, HWp), lambda i: (i, 0, 0)),  # x  (pipelined)
            pl.BlockSpec((C, HWp), lambda i: (0, 0)),         # DCT weight (resident)
            pl.BlockSpec((C, C), lambda i: (0, 0)),           # W1.T (resident)
            pl.BlockSpec((C, C), lambda i: (0, 0)),           # W2.T (resident)
        ],
        out_specs=pl.BlockSpec((Nb, C, HWp), lambda i: (i, 0, 0)),
        compiler_params=pltpu.CompilerParams(
            dimension_semantics=("parallel",)),
    )(x3, dctw, w1t, w2t)

    return out[:N, :, :HW].reshape(N, C, H, W)


# ---------------------------------------------------------------------------
# Pure-JAX reference (for correctness check)
# ---------------------------------------------------------------------------
def reference(x_nchw, spectral_weight, w1, w2):
    att = jnp.sum(x_nchw * spectral_weight[None], axis=(2, 3))      # (N, C)
    h = att @ w1.T
    h = jnp.where(h > 0, h, 0.1 * h)
    h = h @ w2.T
    att = jax.nn.sigmoid(h)
    return x_nchw * att[:, :, None, None]


if __name__ == "__main__":
    N, C, H, W = 2, 4, 16, 16          # dct_h = H, dct_w = W
    key = jax.random.PRNGKey(0)
    kx, kw = jax.random.split(key)

    x = jax.random.normal(kx, (N, C, H, W), jnp.float32)
    spectral_weight = jnp.asarray(make_spectral_weight(C, H, W))
    w1, w2 = make_fc_weights(C, kw)

    out = multi_spectral_attention(x, spectral_weight, w1, w2)
    out = jax.block_until_ready(out)

    ref = reference(x, spectral_weight, w1, w2)
    assert out.shape == (N, C, H, W)
    np.testing.assert_allclose(np.asarray(out), np.asarray(ref),
                               rtol=1e-5, atol=1e-5)
    print("KERNEL_OK")
</pallas_src>

<mosaic_0001>
module attributes {stable_mosaic.version = 11 : i64} {
  func.func @msa_kernel(%arg0: i32, %arg1: memref<2x4x256xf32, #tpu.memory_space<vmem>>, %arg2: memref<4x256xf32, #tpu.memory_space<vmem>>, %arg3: memref<4x4xf32, #tpu.memory_space<vmem>>, %arg4: memref<4x4xf32, #tpu.memory_space<vmem>>, %arg5: memref<2x4x256xf32, #tpu.memory_space<vmem>>) attributes {dimension_semantics = [#tpu.dimension_semantics<parallel>], iteration_bounds = array<i64: 1>, scalar_prefetch = 0 : i64, scratch_operands = 0 : i64, tpu.core_type = #tpu.core_type<tc>, window_params = [{transform_indices = @transform_0, window_bounds = array<i64: 2, 4, 256>}, {pipeline_mode = #tpu.pipeline_mode<synchronous>, transform_indices = @transform_1, window_bounds = array<i64: 4, 256>}, {pipeline_mode = #tpu.pipeline_mode<synchronous>, transform_indices = @transform_2, window_bounds = array<i64: 4, 4>}, {pipeline_mode = #tpu.pipeline_mode<synchronous>, transform_indices = @transform_3, window_bounds = array<i64: 4, 4>}, {transform_indices = @transform_4, window_bounds = array<i64: 2, 4, 256>}]} {
    %c0 = arith.constant 0 : index
    %c0_0 = arith.constant 0 : index
    %c0_1 = arith.constant 0 : index
    %0 = vector.load %arg1[%c0, %c0_0, %c0_1] : memref<2x4x256xf32, #tpu.memory_space<vmem>>, vector<2x4x256xf32>
    %c0_2 = arith.constant 0 : index
    %c0_3 = arith.constant 0 : index
    %1 = vector.load %arg2[%c0_2, %c0_3] : memref<4x256xf32, #tpu.memory_space<vmem>>, vector<4x256xf32>
    %2 = vector.shape_cast %1 : vector<4x256xf32> to vector<1x4x256xf32>
    %3 = vector.broadcast %2 : vector<1x4x256xf32> to vector<2x4x256xf32>
    %4 = arith.mulf %0, %3 : vector<2x4x256xf32>
    %cst = arith.constant dense<0.000000e+00> : vector<2x4xf32>
    %5 = vector.multi_reduction <add>, %4, %cst [2] : vector<2x4x256xf32> to vector<2x4xf32>
    %c0_4 = arith.constant 0 : index
    %c0_5 = arith.constant 0 : index
    %6 = vector.load %arg3[%c0_4, %c0_5] : memref<4x4xf32, #tpu.memory_space<vmem>>, vector<4x4xf32>
    %cst_6 = arith.constant dense<0.000000e+00> : vector<2x4xf32>
    %7 = tpu.matmul %5, %6, %cst_6 {dimension_numbers = #tpu.dot_dimension_numbers<[1], [0], [0], [1], [0, 0, 1, 1], [], []>} : vector<2x4xf32>, vector<4x4xf32>, vector<2x4xf32> -> vector<2x4xf32>
    %cst_7 = arith.constant 0.000000e+00 : f32
    %8 = vector.broadcast %cst_7 : f32 to vector<2x4xf32>
    %9 = arith.cmpf ogt, %7, %8 : vector<2x4xf32>
    %cst_8 = arith.constant 1.000000e-01 : f32
    %10 = vector.broadcast %cst_8 : f32 to vector<2x4xf32>
    %11 = arith.mulf %10, %7 : vector<2x4xf32>
    %12 = arith.select %9, %7, %11 : vector<2x4xi1>, vector<2x4xf32>
    %c0_9 = arith.constant 0 : index
    %c0_10 = arith.constant 0 : index
    %13 = vector.load %arg4[%c0_9, %c0_10] : memref<4x4xf32, #tpu.memory_space<vmem>>, vector<4x4xf32>
    %cst_11 = arith.constant dense<0.000000e+00> : vector<2x4xf32>
    %14 = tpu.matmul %12, %13, %cst_11 {dimension_numbers = #tpu.dot_dimension_numbers<[1], [0], [0], [1], [0, 0, 1, 1], [], []>} : vector<2x4xf32>, vector<4x4xf32>, vector<2x4xf32> -> vector<2x4xf32>
    %15 = arith.negf %14 : vector<2x4xf32>
    %16 = math.exp %15 : vector<2x4xf32>
    %cst_12 = arith.constant 1.000000e+00 : f32
    %17 = vector.broadcast %cst_12 : f32 to vector<2x4xf32>
    %18 = arith.addf %17, %16 : vector<2x4xf32>
    %19 = arith.divf %17, %18 : vector<2x4xf32>
    %20 = vector.shape_cast %19 : vector<2x4xf32> to vector<2x4x1xf32>
    %21 = vector.broadcast %20 : vector<2x4x1xf32> to vector<2x4x256xf32>
    %22 = arith.mulf %0, %21 : vector<2x4x256xf32>
    %c0_13 = arith.constant 0 : index
    %c0_14 = arith.constant 0 : index
    %c0_15 = arith.constant 0 : index
    %23 = vector.load %arg5[%c0_13, %c0_14, %c0_15] : memref<2x4x256xf32, #tpu.memory_space<vmem>>, vector<2x4x256xf32>
    tpu.vector_store %arg5[%c0_13, %c0_14, %c0_15], %22 {strides = array<i32>} : memref<2x4x256xf32, #tpu.memory_space<vmem>>, vector<2x4x256xf32>,
    return
  }
  func.func @transform_0(%arg0: i32) -> (i32, i32, i32) {
    %c0_i32 = arith.constant 0 : i32
    %c0_i32_0 = arith.constant 0 : i32
    %c0_i32_1 = arith.constant 0 : i32
    return %arg0, %c0_i32, %c0_i32_0 : i32, i32, i32
  }
  func.func @transform_1(%arg0: i32) -> (i32, i32) {
    %c0_i32 = arith.constant 0 : i32
    %c0_i32_0 = arith.constant 0 : i32
    %c0_i32_1 = arith.constant 0 : i32
    return %c0_i32, %c0_i32_0 : i32, i32
  }
  func.func @transform_2(%arg0: i32) -> (i32, i32) {
    %c0_i32 = arith.constant 0 : i32
    %c0_i32_0 = arith.constant 0 : i32
    %c0_i32_1 = arith.constant 0 : i32
    return %c0_i32, %c0_i32_0 : i32, i32
  }
  func.func @transform_3(%arg0: i32) -> (i32, i32) {
    %c0_i32 = arith.constant 0 : i32
    %c0_i32_0 = arith.constant 0 : i32
    %c0_i32_1 = arith.constant 0 : i32
    return %c0_i32, %c0_i32_0 : i32, i32
  }
  func.func @transform_4(%arg0: i32) -> (i32, i32, i32) {
    %c0_i32 = arith.constant 0 : i32
    %c0_i32_0 = arith.constant 0 : i32
    %c0_i32_1 = arith.constant 0 : i32
    return %arg0, %c0_i32, %c0_i32_0 : i32, i32, i32
  }
}

</mosaic_0001>

<llo_original>
// kernel: tpu_custom_call.1
$region0: #{tpu_custom_call.1}
  #allocation0 [shape = 'u32[]', space=smem, size = 0x4, offset = 0x4, fixed_abs, tag = 'smem constant byte address 0x4 - core index']
  #allocation1 [shape = 'u32[144,128]{1,0:T(1,128)}', space=vmem, size = 0x12000, scoped, tag = 'internal scratch']
  %s0 = inlined_call_operand.hbm [shape: f32[2,4,256], index: 0, kind: input, shape index: {}]
  %s1 = inlined_call_operand.hbm [shape: f32[4,256], index: 1, kind: input, shape index: {}]
  %s2 = inlined_call_operand.hbm [shape: f32[4,4], index: 2, kind: input, shape index: {}]
  %s3 = inlined_call_operand.vmem [shape: f32[4,4], index: 3, kind: input, shape index: {}]
  %s4 = inlined_call_operand.hbm [shape: f32[2,4,256], index: 4, kind: output, shape index: {}]
  %s5 = sld [smem:[#allocation0]]
  $region38: #{tpu_custom_call.1} parent=0
    _
  %s7 = ssub.s32 1, %s5
  %s8 = scalar_select 0, %s7, %s5
  $region1: #{tpu_custom_call.1} parent=0
    #allocation2 [shape = 'u8[8192]{0}', space=vmem, size = 0x2000, scoped, tag = 'input window, operand 0, single buffered']
    #allocation3 [shape = 's32[1]{0}', space=sflag, size = 0x4, scoped, tag = 'scoped memory for tpu_custom_call.1']
    #allocation4 [shape = 's32[1]{0}', space=sflag, size = 0x4, scoped, tag = 'scoped memory for tpu_custom_call.1']
    #allocation5 [shape = 'u8[4096]{0}', space=vmem, size = 0x1000, scoped, tag = 'input window, operand 1, single buffered']
    #allocation6 [shape = 's32[1]{0}', space=sflag, size = 0x4, scoped, tag = 'scoped memory for tpu_custom_call.1']
    #allocation7 [shape = 'u8[2048]{0}', space=vmem, size = 0x800, scoped, tag = 'input window, operand 2, single buffered']
    #allocation8 [shape = 'u8[8192]{0}', space=vmem, size = 0x2000, scoped, tag = 'output window, operand 0, single buffered']
    %9 = vsyncpa [#allocation3], 0
    %10 = vsyncpa [#allocation6], 0
    %11 = vsyncpa [#allocation4], 0
    // Predicated region
    $region2: #{tpu_custom_call.1} parent=1 // pred_check
      _
    $region3: #{tpu_custom_call.1} parent=1 // pred_check_branch
      %13 = sbr.rel (0) target = $region5
    $region4: #{tpu_custom_call.1} parent=1 // pred_region
      %s15 = ssub.s32 256, 256
      %16 = vsyncadd [#allocation3], %s15
      %s17 = sshll.u32 [#allocation2], 4
      %s18 = int_to_ptr.vmem [resolvable:$true] %s17
      %23 = dma.hbm_to_vmem [thread:$0]  %s0, 256, %s18, [#allocation3], 128, 128, 8
    $region5: #{tpu_custom_call.1} parent=1 // pred_fallthru
      _
    // Predicated region
    $region6: #{tpu_custom_call.1} parent=1 // pred_check
      _
    $region7: #{tpu_custom_call.1} parent=1 // pred_check_branch
      %25 = sbr.rel (0) target = $region9
    $region8: #{tpu_custom_call.1} parent=1 // pred_region
      %s27 = ssub.s32 128, 128
      %28 = vsyncadd [#allocation6], %s27
      %s30 = sshll.u32 [#allocation5], 4
      %s31 = int_to_ptr.vmem [resolvable:$true] %s30
      %33 = dma.hbm_to_vmem [thread:$0]  %s1, 128, %s31, [#allocation6]
    $region9: #{tpu_custom_call.1} parent=1 // pred_fallthru
      _
    // Predicated region
    $region10: #{tpu_custom_call.1} parent=1 // pred_check
      _
    $region11: #{tpu_custom_call.1} parent=1 // pred_check_branch
      %35 = sbr.rel (0) target = $region13
    $region12: #{tpu_custom_call.1} parent=1 // pred_region
      %s37 = ssub.s32 64, 64
      %38 = vsyncadd [#allocation6], %s37
      %s40 = sshll.u32 [#allocation7], 4
      %s41 = int_to_ptr.vmem [resolvable:$true] %s40
      %43 = dma.hbm_to_vmem [thread:$0]  %s2, 64, %s41, [#allocation6]
    $region13: #{tpu_custom_call.1} parent=1 // pred_fallthru
      _
    // Predicated region
    $region14: #{tpu_custom_call.1} parent=1 // pred_check
      _
    $region15: #{tpu_custom_call.1} parent=1 // pred_check_branch
      %45 = sbr.rel (0) target = $region17
    $region16: #{tpu_custom_call.1} parent=1 // pred_region
      _
    $region17: #{tpu_custom_call.1} parent=1 // pred_fallthru
      _
    // Predicated region
    $region18: #{tpu_custom_call.1} parent=1 // pred_check
      _
    $region19: #{tpu_custom_call.1} parent=1 // pred_check_branch
      %47 = sbr.rel (0) target = $region21
    $region20: #{tpu_custom_call.1} parent=1 // pred_region
      %48 = dma.done [#allocation3], 256
    $region21: #{tpu_custom_call.1} parent=1 // pred_fallthru
      _
    // Predicated region
    $region22: #{tpu_custom_call.1} parent=1 // pred_check
      _
    $region23: #{tpu_custom_call.1} parent=1 // pred_check_branch
      %50 = sbr.rel (0) target = $region25
    $region24: #{tpu_custom_call.1} parent=1 // pred_region
      %51 = dma.done [#allocation6], 128
    $region25: #{tpu_custom_call.1} parent=1 // pred_fallthru
      _
    // Predicated region
    $region26: #{tpu_custom_call.1} parent=1 // pred_check
      _
    $region27: #{tpu_custom_call.1} parent=1 // pred_check_branch
      %53 = sbr.rel (0) target = $region29
    $region28: #{tpu_custom_call.1} parent=1 // pred_region
      %54 = dma.done [#allocation6], 64
    $region29: #{tpu_custom_call.1} parent=1 // pred_fallthru
      _
    %v55 = vld [vmem:[#allocation2] sm:$0xff]
    %v56 = vld [vmem:[#allocation2 + $0x8] sm:$0xff]
    %v57 = vld [vmem:[#allocation5] sm:$0xff]
    %v58 = vmul.f32 %v55, %v57
    %v59 = vmul.f32 %v56, %v57
    %v62 = vcombine.high %v58, %v58
    %v63 = vcombine.high %v59, %v59
    %vm66 = vcmask 1043456
    %v67 = vsel %vm66, %v58, 0.0
    %v68 = vsel %vm66, %v62, 0.0
    %v69 = vadd.f32 %v67, %v68
    %70 = vadd.xlane.f32.xlu0 %v69
    %v71 = vpop.xlane.xlu0 %70
    %v72 = vsel %vm66, %v59, 0.0
    %v73 = vsel %vm66, %v63, 0.0
    %v74 = vadd.f32 %v72, %v73
    %75 = vadd.xlane.f32.xlu0 %v74
    %v76 = vpop.xlane.xlu0 %75
    %v77 = vld [vmem:[#allocation7] sm:$0xf]
    %v80 = vlaneseq
    %v81 = vand.u32 %v80, 127
    %v82 = vlaneseq
    %v83 = vshrl.u32 %v82, 7
    %v84 = vsub.s32 %v81, %v83
    %v85 = vrot.slane %v71, %v84
    %v86 = vlaneseq
    %v87 = vshrl.u32 %v86, 7
    %v88 = vsub.s32 %v81, %v87
    %v89 = vrot.slane %v76, %v88
    %vm90 = vcmask 1041409
    %v91 = vsel %vm90, %v89, %v85
    %vm92 = vcmask 31744
    %v93 = vsel %vm92, %v91, 0
    %v96 = vsel %vm66, %v77, 0
    %98 = vmatprep.subr.mxu0 0.0
    %99 = vmatpush1.msra.mxu0 0.0
    %100 = vmatprep.subr.mxu0 0.0
    %101 = vmatpush1.msra.mxu0 0.0
    %102 = vmatprep.subr.mxu0 0.0
    %103 = vmatpush1.msra.mxu0 0.0
    %104 = vmatprep.subr.mxu0 0.0
    %105 = vmatpush1.msra.mxu0 0.0
    %106 = vmatprep.subr.mxu0 0.0
    %107 = vmatpush1.msra.mxu0 0.0
    %108 = vmatprep.subr.mxu0 0.0
    %109 = vmatpush1.msra.mxu0 0.0
    %110 = vmatprep.subr.mxu0 0.0
    %111 = vmatpush1.msra.mxu0 0.0
    %112 = vmatprep.subr.mxu0 0.0
    %113 = vmatpush1.msra.mxu0 0.0
    %114 = vmatprep.subr.mxu0 0.0
    %115 = vmatpush1.msra.mxu0 0.0
    %116 = vmatprep.subr.mxu0 0.0
    %117 = vmatpush1.msra.mxu0 0.0
    %118 = vmatprep.subr.mxu0 0.0
    %119 = vmatpush1.msra.mxu0 0.0
    %120 = vmatprep.subr.mxu0 0.0
    %121 = vmatpush1.msra.mxu0 0.0
    %122 = vmatprep.subr.mxu0 0.0
    %123 = vmatpush1.msra.mxu0 0.0
    %124 = vmatprep.subr.mxu0 0.0
    %125 = vmatpush1.msra.mxu0 0.0
    %126 = vmatprep.subr.mxu0 0.0
    %127 = vmatpush1.msra.mxu0 0.0
    %128 = vmatprep.subr.mxu0 0.0
    %129 = vmatpush1.msra.mxu0 %v96
    %130 = vmatprep.subr.mxu0 0.0
    %131 = vmatpush2.msra.mxu0 0.0
    %132 = vmatprep.subr.mxu0 0.0
    %133 = vmatpush2.msra.mxu0 0.0
    %134 = vmatprep.subr.mxu0 0.0
    %135 = vmatpush2.msra.mxu0 0.0
    %136 = vmatprep.subr.mxu0 0.0
    %137 = vmatpush2.msra.mxu0 0.0
    %138 = vmatprep.subr.mxu0 0.0
    %139 = vmatpush2.msra.mxu0 0.0
    %140 = vmatprep.subr.mxu0 0.0
    %141 = vmatpush2.msra.mxu0 0.0
    %142 = vmatprep.subr.mxu0 0.0
    %143 = vmatpush2.msra.mxu0 0.0
    %144 = vmatprep.subr.mxu0 0.0
    %145 = vmatpush2.msra.mxu0 0.0
    %146 = vmatprep.subr.mxu0 0.0
    %147 = vmatpush2.msra.mxu0 0.0
    %148 = vmatprep.subr.mxu0 0.0
    %149 = vmatpush2.msra.mxu0 0.0
    %150 = vmatprep.subr.mxu0 0.0
    %151 = vmatpush2.msra.mxu0 0.0
    %152 = vmatprep.subr.mxu0 0.0
    %153 = vmatpush2.msra.mxu0 0.0
    %154 = vmatprep.subr.mxu0 0.0
    %155 = vmatpush2.msra.mxu0 0.0
    %156 = vmatprep.subr.mxu0 0.0
    %157 = vmatpush2.msra.mxu0 0.0
    %158 = vmatprep.subr.mxu0 0.0
    %159 = vmatpush2.msra.mxu0 0.0
    %160 = vmatprep.subr.mxu0 0.0
    %161 = vmatpush2.msra.mxu0 0.0
    %162 = vmatprep.mubr.f32.mxu0 0.0
    %163 = vmatmul.mubr.f32.gmra.mxu0 %v93
    %v164 = vpop.f32.mrf.mxu0
    %v165 = vadd.f32 0.0, %v164
    %v166 = vpop.f32.mrf.mxu0
    %167 = vdwg.mxu0
    %vm168 = vcmp.gt.f32.partialorder %v165, 0.0
    %v169 = vmul.f32 %v165, 0.1
    %v170 = vsel %vm168, %v165, %v169
    %v171 = vld [vmem:[%s3] sm:$0xf]
    %v173 = vsel %vm92, %v170, 0
    %v176 = vsel %vm66, %v171, 0
    %178 = vmatprep.subr.mxu0 0.0
    %179 = vmatpush1.msra.mxu0 0.0
    %180 = vmatprep.subr.mxu0 0.0
    %181 = vmatpush1.msra.mxu0 0.0
    %182 = vmatprep.subr.mxu0 0.0
    %183 = vmatpush1.msra.mxu0 0.0
    %184 = vmatprep.subr.mxu0 0.0
    %185 = vmatpush1.msra.mxu0 0.0
    %186 = vmatprep.subr.mxu0 0.0
    %187 = vmatpush1.msra.mxu0 0.0
    %188 = vmatprep.subr.mxu0 0.0
    %189 = vmatpush1.msra.mxu0 0.0
    %190 = vmatprep.subr.mxu0 0.0
    %191 = vmatpush1.msra.mxu0 0.0
    %192 = vmatprep.subr.mxu0 0.0
    %193 = vmatpush1.msra.mxu0 0.0
    %194 = vmatprep.subr.mxu0 0.0
    %195 = vmatpush1.msra.mxu0 0.0
    %196 = vmatprep.subr.mxu0 0.0
    %197 = vmatpush1.msra.mxu0 0.0
    %198 = vmatprep.subr.mxu0 0.0
    %199 = vmatpush1.msra.mxu0 0.0
    %200 = vmatprep.subr.mxu0 0.0
    %201 = vmatpush1.msra.mxu0 0.0
    %202 = vmatprep.subr.mxu0 0.0
    %203 = vmatpush1.msra.mxu0 0.0
    %204 = vmatprep.subr.mxu0 0.0
    %205 = vmatpush1.msra.mxu0 0.0
    %206 = vmatprep.subr.mxu0 0.0
    %207 = vmatpush1.msra.mxu0 0.0
    %208 = vmatprep.subr.mxu0 0.0
    %209 = vmatpush1.msra.mxu0 %v176
    %210 = vmatprep.subr.mxu0 0.0
    %211 = vmatpush2.msra.mxu0 0.0
    %212 = vmatprep.subr.mxu0 0.0
    %213 = vmatpush2.msra.mxu0 0.0
    %214 = vmatprep.subr.mxu0 0.0
    %215 = vmatpush2.msra.mxu0 0.0
    %216 = vmatprep.subr.mxu0 0.0
    %217 = vmatpush2.msra.mxu0 0.0
    %218 = vmatprep.subr.mxu0 0.0
    %219 = vmatpush2.msra.mxu0 0.0
    %220 = vmatprep.subr.mxu0 0.0
    %221 = vmatpush2.msra.mxu0 0.0
    %222 = vmatprep.subr.mxu0 0.0
    %223 = vmatpush2.msra.mxu0 0.0
    %224 = vmatprep.subr.mxu0 0.0
    %225 = vmatpush2.msra.mxu0 0.0
    %226 = vmatprep.subr.mxu0 0.0
    %227 = vmatpush2.msra.mxu0 0.0
    %228 = vmatprep.subr.mxu0 0.0
    %229 = vmatpush2.msra.mxu0 0.0
    %230 = vmatprep.subr.mxu0 0.0
    %231 = vmatpush2.msra.mxu0 0.0
    %232 = vmatprep.subr.mxu0 0.0
    %233 = vmatpush2.msra.mxu0 0.0
    %234 = vmatprep.subr.mxu0 0.0
    %235 = vmatpush2.msra.mxu0 0.0
    %236 = vmatprep.subr.mxu0 0.0
    %237 = vmatpush2.msra.mxu0 0.0
    %238 = vmatprep.subr.mxu0 0.0
    %239 = vmatpush2.msra.mxu0 0.0
    %240 = vmatprep.subr.mxu0 0.0
    %241 = vmatpush2.msra.mxu0 0.0
    %242 = vmatprep.mubr.f32.mxu0 0.0
    %243 = vmatmul.mubr.f32.gmra.mxu0 %v173
    %v244 = vpop.f32.mrf.mxu0
    %v245 = vadd.f32 0.0, %v244
    %v246 = vpop.f32.mrf.mxu0
    %247 = vdwg.mxu0
    %v248 = vxor.u32 %v245, 2147483648
    %v249 = vmul.f32 %v248, 1.442695
    %v250 = vpow.pop %v249
    %v251 = vadd.f32 %v250, 1.0
    %v252 = vrcp.pop %v251
    %v253 = vmul.f32 1.0, %v252
    %v254 = vlaneseq
    %v255 = vshrl.u32 %v254, 7
    %v256 = vsub.s32 0, %v255
    %v257 = vrot.slane %v253, %v256
    %259 = vbcast.lane.b32.xlu0 %v257, 256
    %v260 = vpop.permute.xlu0 %259
    %v261 = vlaneseq
    %v262 = vshrl.u32 %v261, 7
    %v263 = vsub.s32 1, %v262
    %v264 = vrot.slane %v253, %v263
    %266 = vbcast.lane.b32.xlu0 %v264, 256
    %v267 = vpop.permute.xlu0 %266
    %v271 = vunpack.c.l.s4 839922192
    %v272 = vunpack.c.0.s8 %v271
    %v273 = vlaneseq
    %v274 = vshrl.u32 %v273, 7
    %v275 = vsub.s32 %v272, %v274
    %v276 = vrot.slane %v260, %v275
    %v278 = vunpack.c.l.s4 839922192
    %v279 = vunpack.c.0.s8 %v278
    %v280 = vlaneseq
    %v281 = vshrl.u32 %v280, 7
    %v282 = vsub.s32 %v279, %v281
    %v283 = vrot.slane %v267, %v282
    %v286 = vmul.f32 %v55, %v276
    %v287 = vmul.f32 %v56, %v283
    %288 = vst [vmem:[#allocation8] sm:$0xff] %v286
    %289 = vst [vmem:[#allocation8 + $0x8] sm:$0xff] %v287
    // Predicated region
    $region30: #{tpu_custom_call.1} parent=1 // pred_check
      _
    $region31: #{tpu_custom_call.1} parent=1 // pred_check_branch
      %291 = sbr.rel (0) target = $region33
    $region32: #{tpu_custom_call.1} parent=1 // pred_region
      %s293 = ssub.s32 256, 256
      %294 = vsyncadd [#allocation4], %s293
      %s295 = sshll.u32 [#allocation8], 4
      %s296 = int_to_ptr.vmem [resolvable:$true] %s295
      %301 = dma.vmem_to_hbm [thread:$0]  %s296, 256, %s4, [#allocation4], 128, 128, 8
    $region33: #{tpu_custom_call.1} parent=1 // pred_fallthru
      _
    // Predicated region
    $region34: #{tpu_custom_call.1} parent=1 // pred_check
      _
    $region35: #{tpu_custom_call.1} parent=1 // pred_check_branch
      %303 = sbr.rel (0) target = $region37
    $region36: #{tpu_custom_call.1} parent=1 // pred_region
      %304 = dma.done [#allocation4], 256
    $region37: #{tpu_custom_call.1} parent=1 // pred_fallthru
      _
    %305 = vsyncpa [#allocation3], 1
    %306 = vsyncpa [#allocation6], 1
    %307 = vsyncpa [#allocation4], 1

</llo_original>
